<compile_context>
chip_gen: v7x
topology: tpu7x:2x2x1
jax: 0.10.0
libtpu: 0.0.40
codegen_flags: <defaults>
</compile_context>

<pallas_src>
import math

import jax
import jax.numpy as jnp
from jax.experimental import pallas as pl
from jax.experimental.pallas import tpu as pltpu

INPUT_DIM = 4
CONTEXT_DIM = 4
HIDDEN_DIM = 32
OUTPUT_DIM = 4
BATCH = 16
XC_DIM = INPUT_DIM + CONTEXT_DIM          # 8  (packed [x | ctx])

# ------------- single packed weight+bias slab layout (static constants) ------
# Every weight block starts at lane 0 and an 8-aligned sublane row; every bias
# gets its own sublane row at lane 0.  One slab -> one DMA.
R_A = 0        # ( 8, 64)  block_diag(w0h_l0, w0c_l0)         [x|ctx] -> [h|c]
R_R0 = 8       # ( 8, 32)  rows 0:4 = w01_l0, rows 4:8 = 0     residual (x only)
R_B = 16       # (64, 32)  vstack(wh1_l0, wc1_l0)              [h|c] -> hidden
R_C = 80       # ( 8,  4)  rows 0:4 = 0, rows 4:8 = w0c_fc     ctx path of fc
R_D = 88       # (32,  4)  w0h_fc
R_R1 = 120     # (32,  4)  w01_fc                              residual (hidden)
R_E = 152      # ( 4,  4)  wh1_fc   (8-row padded block)
R_F = 160      # ( 4,  4)  wc1_fc
RB_A = 168     # ( 1, 64)  [b0h_l0 | b0c_l0]
RB_B = 169     # ( 1, 32)  bh1 + bc1 + b01        (layer 0)
RB_C = 170     # ( 1,  4)  b0c_fc
RB_D = 171     # ( 1,  4)  b0h_fc
RB_OUT = 172   # ( 1,  4)  bh1_fc + bc1_fc + b01_fc
W_PACK_ROWS = 176
W_PACK_COLS = 128


# ----------------------------- kernel ----------------------------------------


def context_resmlp_kernel(xc_ref, w_ref, out_ref):
    xc = xc_ref[...]                                        # (B, 8) = [x | ctx]

    def w(r0, rows, cols):
        return w_ref[r0:r0 + rows, 0:cols]

    def b(row, cols):
        return w_ref[row:row + 1, 0:cols]

    def dot(a, bm):
        return jnp.dot(a, bm, preferred_element_type=jnp.float32)

    # ---- independent dots (only depend on xc): off the critical chain -------
    skip0 = dot(xc, w(R_R0, XC_DIM, HIDDEN_DIM))            # x @ w01      (B,32)
    c2 = jnp.maximum(dot(xc, w(R_C, XC_DIM, OUTPUT_DIM))    # relu(ctx @ w0c_fc)
                     + b(RB_C, OUTPUT_DIM), 0.0)

    # ---- layer 0 (ContextResLinear) + outer relu ----------------------------
    hc0 = jnp.maximum(dot(xc, w(R_A, XC_DIM, 2 * HIDDEN_DIM))
                      + b(RB_A, 2 * HIDDEN_DIM), 0.0)       # [relu(x@w0h) | relu(ctx@w0c)]
    lyr0 = (dot(hc0, w(R_B, 2 * HIDDEN_DIM, HIDDEN_DIM))    # h@wh1 + c@wc1
            + skip0 + b(RB_B, HIDDEN_DIM))                  # + x@w01 + (bh1+bc1+b01)
    hidden = jnp.maximum(lyr0, 0.0)

    # ---- fc (ContextResLinear), use_nonlinearity_output=False ---------------
    skip2 = dot(hidden, w(R_R1, HIDDEN_DIM, OUTPUT_DIM))    # hidden @ w01_fc
    h2 = jnp.maximum(dot(hidden, w(R_D, HIDDEN_DIM, OUTPUT_DIM))
                     + b(RB_D, OUTPUT_DIM), 0.0)            # relu(hidden @ w0h_fc)
    out = (dot(h2, w(R_E, OUTPUT_DIM, OUTPUT_DIM))          # h2 @ wh1_fc
           + dot(c2, w(R_F, OUTPUT_DIM, OUTPUT_DIM))        # c2 @ wc1_fc
           + skip2 + b(RB_OUT, OUTPUT_DIM))                 # + skip + summed bias

    out_ref[...] = out.astype(out_ref.dtype)


# ----------------------------- wrapper ----------------------------------------


def context_resmlp(x, ctx, w_pack):
    batch = x.shape[0]
    xc = jnp.concatenate([x, ctx], axis=1)   # pack once in the wrapper (1 DMA)
    return pl.pallas_call(
        context_resmlp_kernel,
        out_shape=jax.ShapeDtypeStruct((batch, OUTPUT_DIM), x.dtype),
        grid_spec=pltpu.PrefetchScalarGridSpec(
            num_scalar_prefetch=0,
            grid=(1,),  # single step: whole problem fits trivially in VMEM
            in_specs=[
                pl.BlockSpec((batch, XC_DIM), lambda i: (0, 0)),
                pl.BlockSpec((W_PACK_ROWS, W_PACK_COLS), lambda i: (0, 0)),
            ],
            out_specs=pl.BlockSpec((batch, OUTPUT_DIM), lambda i: (0, 0)),
        ),
        compiler_params=pltpu.CompilerParams(
            dimension_semantics=("arbitrary",)),
    )(xc, w_pack)


# ----------------------------- params / packing / reference -------------------


def init_wnl_params(key, in_features, out_features):
    """WeightNormalizedLinear(norm=False, mask=None): effective W = scale[:,None]*direction."""
    k_dir, k_bias = jax.random.split(key)
    stdv = 1.0 / math.sqrt(in_features)
    direction = jax.random.uniform(
        k_dir, (out_features, in_features), minval=-stdv, maxval=stdv, dtype=jnp.float32
    )
    scale = jnp.ones((out_features,), jnp.float32)  # .uniform_(1, 1)
    bias = jax.random.uniform(
        k_bias, (out_features,), minval=-stdv, maxval=stdv, dtype=jnp.float32
    )
    weight = scale[:, None] * direction               # (out, in)
    return weight.T, bias.reshape(1, out_features)    # (in, out), (1, out)


def pack_params(params):
    """Pack all weights + biases into ONE (176, 128) f32 slab (single DMA)."""
    (w0h, b0h), (wh1, bh1), (w01, b01), (w0c, b0c), (wc1, bc1) = params[0:5]
    (fw0h, fb0h), (fwh1, fbh1), (fw01, fb01), (fw0c, fb0c), (fwc1, fbc1) = params[5:10]

    w = jnp.zeros((W_PACK_ROWS, W_PACK_COLS), jnp.float32)
    # layer 0: block-diag A  -> [x|ctx] @ W_A = [x@w0h | ctx@w0c]
    w = w.at[R_A:R_A + INPUT_DIM, 0:HIDDEN_DIM].set(w0h)
    w = w.at[R_A + INPUT_DIM:R_A + XC_DIM, HIDDEN_DIM:2 * HIDDEN_DIM].set(w0c)
    # layer 0: residual (x-only rows, ctx rows stay zero)
    w = w.at[R_R0:R_R0 + INPUT_DIM, 0:HIDDEN_DIM].set(w01)
    # layer 0: B = vstack(wh1, wc1)
    w = w.at[R_B:R_B + HIDDEN_DIM, 0:HIDDEN_DIM].set(wh1)
    w = w.at[R_B + HIDDEN_DIM:R_B + 2 * HIDDEN_DIM, 0:HIDDEN_DIM].set(wc1)
    # fc: ctx path (ctx-only rows, x rows stay zero)
    w = w.at[R_C + INPUT_DIM:R_C + XC_DIM, 0:OUTPUT_DIM].set(fw0c)
    # fc: hidden path / residual / h1 / c1
    w = w.at[R_D:R_D + HIDDEN_DIM, 0:OUTPUT_DIM].set(fw0h)
    w = w.at[R_R1:R_R1 + HIDDEN_DIM, 0:OUTPUT_DIM].set(fw01)
    w = w.at[R_E:R_E + OUTPUT_DIM, 0:OUTPUT_DIM].set(fwh1)
    w = w.at[R_F:R_F + OUTPUT_DIM, 0:OUTPUT_DIM].set(fwc1)
    # biases: one sublane row each, lane offset 0
    w = w.at[RB_A, 0:2 * HIDDEN_DIM].set(jnp.concatenate([b0h, b0c], axis=1)[0])
    w = w.at[RB_B, 0:HIDDEN_DIM].set((bh1 + bc1 + b01)[0])
    w = w.at[RB_C, 0:OUTPUT_DIM].set(fb0c[0])
    w = w.at[RB_D, 0:OUTPUT_DIM].set(fb0h[0])
    w = w.at[RB_OUT, 0:OUTPUT_DIM].set((fbh1 + fbc1 + fb01)[0])
    return w


def reference(x, ctx, params):
    """Unfused pure-JAX reference (mirrors the PyTorch module)."""
    def lin(v, wt, b):
        return v @ wt + b

    def crl(inp, c, p):
        (w0h, b0h), (wh1, bh1), (w01, b01), (w0c, b0c), (wc1, bc1) = p
        h = jnp.maximum(lin(inp, w0h, b0h), 0.0)
        outi = lin(h, wh1, bh1)
        cc = jnp.maximum(lin(c, w0c, b0c), 0.0)
        outc = lin(cc, wc1, bc1)
        return outi + outc + lin(inp, w01, b01)

    hidden = jnp.maximum(crl(x, ctx, params[:5]), 0.0)
    return crl(hidden, ctx, params[5:])


# ----------------------------- main -------------------------------------------

if __name__ == "__main__":
    key = jax.random.PRNGKey(0)
    keys = jax.random.split(key, 12)

    x = jax.random.normal(keys[0], (BATCH, INPUT_DIM), jnp.float32)
    ctx = jax.random.normal(keys[1], (BATCH, CONTEXT_DIM), jnp.float32)

    # (in_features, out_features) per WeightNormalizedLinear, in module order:
    # layer0: dot_0h, dot_h1, dot_01, dot_0c, dot_c1 ; fc: dot_0h, dot_h1, dot_01, dot_0c, dot_c1
    shapes = [
        (INPUT_DIM, HIDDEN_DIM), (HIDDEN_DIM, HIDDEN_DIM), (INPUT_DIM, HIDDEN_DIM),
        (CONTEXT_DIM, HIDDEN_DIM), (HIDDEN_DIM, HIDDEN_DIM),
        (HIDDEN_DIM, OUTPUT_DIM), (OUTPUT_DIM, OUTPUT_DIM), (HIDDEN_DIM, OUTPUT_DIM),
        (CONTEXT_DIM, OUTPUT_DIM), (OUTPUT_DIM, OUTPUT_DIM),
    ]
    params = [init_wnl_params(k, fin, fout) for k, (fin, fout) in zip(keys[2:12], shapes)]

    w_pack = pack_params(params)

    out = context_resmlp(x, ctx, w_pack)
    jax.block_until_ready(out)

    ref = reference(x, ctx, params)
    assert out.shape == (BATCH, OUTPUT_DIM)
    assert jnp.allclose(out, ref, atol=1e-5, rtol=1e-5), "mismatch vs pure-JAX reference"

    print("KERNEL_OK")
</pallas_src>

<mosaic_0001>
module attributes {stable_mosaic.version = 11 : i64} {
  func.func @context_resmlp_kernel(%arg0: i32, %arg1: memref<16x8xf32, #tpu.memory_space<vmem>>, %arg2: memref<176x128xf32, #tpu.memory_space<vmem>>, %arg3: memref<16x4xf32, #tpu.memory_space<vmem>>) attributes {dimension_semantics = [#tpu.dimension_semantics<arbitrary>], iteration_bounds = array<i64: 1>, scalar_prefetch = 0 : i64, scratch_operands = 0 : i64, tpu.core_type = #tpu.core_type<tc>, window_params = [{pipeline_mode = #tpu.pipeline_mode<synchronous>, transform_indices = @transform_0, window_bounds = array<i64: 16, 8>}, {pipeline_mode = #tpu.pipeline_mode<synchronous>, transform_indices = @transform_1, window_bounds = array<i64: 176, 128>}, {pipeline_mode = #tpu.pipeline_mode<synchronous>, transform_indices = @transform_2, window_bounds = array<i64: 16, 4>}]} {
    %c0 = arith.constant 0 : index
    %c0_0 = arith.constant 0 : index
    %0 = vector.load %arg1[%c0, %c0_0] : memref<16x8xf32, #tpu.memory_space<vmem>>, vector<16x8xf32>
    %c8 = arith.constant 8 : index
    %c0_1 = arith.constant 0 : index
    %1 = vector.load %arg2[%c8, %c0_1] : memref<176x128xf32, #tpu.memory_space<vmem>>, vector<8x32xf32>
    %cst = arith.constant dense<0.000000e+00> : vector<16x32xf32>
    %2 = tpu.matmul %0, %1, %cst {dimension_numbers = #tpu.dot_dimension_numbers<[1], [0], [0], [1], [0, 0, 1, 1], [], []>} : vector<16x8xf32>, vector<8x32xf32>, vector<16x32xf32> -> vector<16x32xf32>
    %c80 = arith.constant 80 : index
    %c0_2 = arith.constant 0 : index
    %3 = vector.load %arg2[%c80, %c0_2] : memref<176x128xf32, #tpu.memory_space<vmem>>, vector<8x4xf32>
    %cst_3 = arith.constant dense<0.000000e+00> : vector<16x4xf32>
    %4 = tpu.matmul %0, %3, %cst_3 {dimension_numbers = #tpu.dot_dimension_numbers<[1], [0], [0], [1], [0, 0, 1, 1], [], []>} : vector<16x8xf32>, vector<8x4xf32>, vector<16x4xf32> -> vector<16x4xf32>
    %c170 = arith.constant 170 : index
    %c0_4 = arith.constant 0 : index
    %5 = vector.load %arg2[%c170, %c0_4] : memref<176x128xf32, #tpu.memory_space<vmem>>, vector<1x4xf32>
    %6 = vector.broadcast %5 : vector<1x4xf32> to vector<16x4xf32>
    %7 = arith.addf %4, %6 : vector<16x4xf32>
    %cst_5 = arith.constant 0.000000e+00 : f32
    %8 = vector.broadcast %cst_5 : f32 to vector<16x4xf32>
    %9 = arith.maximumf %7, %8 : vector<16x4xf32>
    %c0_6 = arith.constant 0 : index
    %c0_7 = arith.constant 0 : index
    %10 = vector.load %arg2[%c0_6, %c0_7] : memref<176x128xf32, #tpu.memory_space<vmem>>, vector<8x64xf32>
    %cst_8 = arith.constant dense<0.000000e+00> : vector<16x64xf32>
    %11 = tpu.matmul %0, %10, %cst_8 {dimension_numbers = #tpu.dot_dimension_numbers<[1], [0], [0], [1], [0, 0, 1, 1], [], []>} : vector<16x8xf32>, vector<8x64xf32>, vector<16x64xf32> -> vector<16x64xf32>
    %c168 = arith.constant 168 : index
    %c0_9 = arith.constant 0 : index
    %12 = vector.load %arg2[%c168, %c0_9] : memref<176x128xf32, #tpu.memory_space<vmem>>, vector<1x64xf32>
    %13 = vector.broadcast %12 : vector<1x64xf32> to vector<16x64xf32>
    %14 = arith.addf %11, %13 : vector<16x64xf32>
    %cst_10 = arith.constant 0.000000e+00 : f32
    %15 = vector.broadcast %cst_10 : f32 to vector<16x64xf32>
    %16 = arith.maximumf %14, %15 : vector<16x64xf32>
    %c16 = arith.constant 16 : index
    %c0_11 = arith.constant 0 : index
    %17 = vector.load %arg2[%c16, %c0_11] : memref<176x128xf32, #tpu.memory_space<vmem>>, vector<64x32xf32>
    %cst_12 = arith.constant dense<0.000000e+00> : vector<16x32xf32>
    %18 = tpu.matmul %16, %17, %cst_12 {dimension_numbers = #tpu.dot_dimension_numbers<[1], [0], [0], [1], [0, 0, 1, 1], [], []>} : vector<16x64xf32>, vector<64x32xf32>, vector<16x32xf32> -> vector<16x32xf32>
    %19 = arith.addf %18, %2 : vector<16x32xf32>
    %c169 = arith.constant 169 : index
    %c0_13 = arith.constant 0 : index
    %20 = vector.load %arg2[%c169, %c0_13] : memref<176x128xf32, #tpu.memory_space<vmem>>, vector<1x32xf32>
    %21 = vector.broadcast %20 : vector<1x32xf32> to vector<16x32xf32>
    %22 = arith.addf %19, %21 : vector<16x32xf32>
    %cst_14 = arith.constant 0.000000e+00 : f32
    %23 = vector.broadcast %cst_14 : f32 to vector<16x32xf32>
    %24 = arith.maximumf %22, %23 : vector<16x32xf32>
    %c120 = arith.constant 120 : index
    %c0_15 = arith.constant 0 : index
    %25 = vector.load %arg2[%c120, %c0_15] : memref<176x128xf32, #tpu.memory_space<vmem>>, vector<32x4xf32>
    %cst_16 = arith.constant dense<0.000000e+00> : vector<16x4xf32>
    %26 = tpu.matmul %24, %25, %cst_16 {dimension_numbers = #tpu.dot_dimension_numbers<[1], [0], [0], [1], [0, 0, 1, 1], [], []>} : vector<16x32xf32>, vector<32x4xf32>, vector<16x4xf32> -> vector<16x4xf32>
    %c88 = arith.constant 88 : index
    %c0_17 = arith.constant 0 : index
    %27 = vector.load %arg2[%c88, %c0_17] : memref<176x128xf32, #tpu.memory_space<vmem>>, vector<32x4xf32>
    %cst_18 = arith.constant dense<0.000000e+00> : vector<16x4xf32>
    %28 = tpu.matmul %24, %27, %cst_18 {dimension_numbers = #tpu.dot_dimension_numbers<[1], [0], [0], [1], [0, 0, 1, 1], [], []>} : vector<16x32xf32>, vector<32x4xf32>, vector<16x4xf32> -> vector<16x4xf32>
    %c171 = arith.constant 171 : index
    %c0_19 = arith.constant 0 : index
    %29 = vector.load %arg2[%c171, %c0_19] : memref<176x128xf32, #tpu.memory_space<vmem>>, vector<1x4xf32>
    %30 = vector.broadcast %29 : vector<1x4xf32> to vector<16x4xf32>
    %31 = arith.addf %28, %30 : vector<16x4xf32>
    %cst_20 = arith.constant 0.000000e+00 : f32
    %32 = vector.broadcast %cst_20 : f32 to vector<16x4xf32>
    %33 = arith.maximumf %31, %32 : vector<16x4xf32>
    %c152 = arith.constant 152 : index
    %c0_21 = arith.constant 0 : index
    %34 = vector.load %arg2[%c152, %c0_21] : memref<176x128xf32, #tpu.memory_space<vmem>>, vector<4x4xf32>
    %cst_22 = arith.constant dense<0.000000e+00> : vector<16x4xf32>
    %35 = tpu.matmul %33, %34, %cst_22 {dimension_numbers = #tpu.dot_dimension_numbers<[1], [0], [0], [1], [0, 0, 1, 1], [], []>} : vector<16x4xf32>, vector<4x4xf32>, vector<16x4xf32> -> vector<16x4xf32>
    %c160 = arith.constant 160 : index
    %c0_23 = arith.constant 0 : index
    %36 = vector.load %arg2[%c160, %c0_23] : memref<176x128xf32, #tpu.memory_space<vmem>>, vector<4x4xf32>
    %cst_24 = arith.constant dense<0.000000e+00> : vector<16x4xf32>
    %37 = tpu.matmul %9, %36, %cst_24 {dimension_numbers = #tpu.dot_dimension_numbers<[1], [0], [0], [1], [0, 0, 1, 1], [], []>} : vector<16x4xf32>, vector<4x4xf32>, vector<16x4xf32> -> vector<16x4xf32>
    %38 = arith.addf %35, %37 : vector<16x4xf32>
    %39 = arith.addf %38, %26 : vector<16x4xf32>
    %c172 = arith.constant 172 : index
    %c0_25 = arith.constant 0 : index
    %40 = vector.load %arg2[%c172, %c0_25] : memref<176x128xf32, #tpu.memory_space<vmem>>, vector<1x4xf32>
    %41 = vector.broadcast %40 : vector<1x4xf32> to vector<16x4xf32>
    %42 = arith.addf %39, %41 : vector<16x4xf32>
    %c0_26 = arith.constant 0 : index
    %c0_27 = arith.constant 0 : index
    %43 = vector.load %arg3[%c0_26, %c0_27] : memref<16x4xf32, #tpu.memory_space<vmem>>, vector<16x4xf32>
    tpu.vector_store %arg3[%c0_26, %c0_27], %42 {strides = array<i32>} : memref<16x4xf32, #tpu.memory_space<vmem>>, vector<16x4xf32>,
    return
  }
  func.func @transform_0(%arg0: i32) -> (i32, i32) {
    %c0_i32 = arith.constant 0 : i32
    %c0_i32_0 = arith.constant 0 : i32
    %c0_i32_1 = arith.constant 0 : i32
    return %c0_i32, %c0_i32_0 : i32, i32
  }
  func.func @transform_1(%arg0: i32) -> (i32, i32) {
    %c0_i32 = arith.constant 0 : i32
    %c0_i32_0 = arith.constant 0 : i32
    %c0_i32_1 = arith.constant 0 : i32
    return %c0_i32, %c0_i32_0 : i32, i32
  }
  func.func @transform_2(%arg0: i32) -> (i32, i32) {
    %c0_i32 = arith.constant 0 : i32
    %c0_i32_0 = arith.constant 0 : i32
    %c0_i32_1 = arith.constant 0 : i32
    return %c0_i32, %c0_i32_0 : i32, i32
  }
}

</mosaic_0001>

<llo_original>
// kernel: tpu_custom_call.1
$region0: #{tpu_custom_call.1}
  #allocation0 [shape = 'u32[]', space=smem, size = 0x4, offset = 0x4, fixed_abs, tag = 'smem constant byte address 0x4 - core index']
  #allocation1 [shape = 'u32[144,128]{1,0:T(1,128)}', space=vmem, size = 0x12000, scoped, tag = 'internal scratch']
  %s0 = inlined_call_operand.vmem [shape: f32[16,8], index: 0, kind: input, shape index: {}]
  %s1 = inlined_call_operand.hbm [shape: f32[176,128], index: 1, kind: input, shape index: {}]
  %s2 = inlined_call_operand.vmem [shape: f32[16,4], index: 2, kind: output, shape index: {}]
  %s3 = sld [smem:[#allocation0]]
  $region22: #{tpu_custom_call.1} parent=0
    _
  %s5 = ssub.s32 1, %s3
  %s6 = scalar_select 0, %s5, %s3
  $region1: #{tpu_custom_call.1} parent=0
    #allocation2 [shape = 'u8[90112]{0}', space=vmem, size = 0x16000, scoped, tag = 'input window, operand 1, single buffered']
    #allocation3 [shape = 's32[1]{0}', space=sflag, size = 0x4, scoped, tag = 'scoped memory for tpu_custom_call.1']
    %7 = vsyncpa [#allocation3], 0
    // Predicated region
    $region2: #{tpu_custom_call.1} parent=1 // pred_check
      _
    $region3: #{tpu_custom_call.1} parent=1 // pred_check_branch
      %9 = sbr.rel (0) target = $region5
    $region4: #{tpu_custom_call.1} parent=1 // pred_region
      _
    $region5: #{tpu_custom_call.1} parent=1 // pred_fallthru
      _
    // Predicated region
    $region6: #{tpu_custom_call.1} parent=1 // pred_check
      _
    $region7: #{tpu_custom_call.1} parent=1 // pred_check_branch
      %11 = sbr.rel (0) target = $region9
    $region8: #{tpu_custom_call.1} parent=1 // pred_region
      %s13 = ssub.s32 2816, 2816
      %14 = vsyncadd [#allocation3], %s13
      %s15 = sshll.u32 [#allocation2], 4
      %s16 = int_to_ptr.vmem [resolvable:$true] %s15
      %21 = dma.hbm_to_vmem [thread:$0]  %s1, 2816, %s16, [#allocation3], 128, 128, 8
    $region9: #{tpu_custom_call.1} parent=1 // pred_fallthru
      _
    // Predicated region
    $region10: #{tpu_custom_call.1} parent=1 // pred_check
      _
    $region11: #{tpu_custom_call.1} parent=1 // pred_check_branch
      %23 = sbr.rel (0) target = $region13
    $region12: #{tpu_custom_call.1} parent=1 // pred_region
      %24 = dma.done [#allocation3], 2816
    $region13: #{tpu_custom_call.1} parent=1 // pred_fallthru
      _
    %v25 = vld [vmem:[%s0] sm:$0xff]
    %v26 = vld [vmem:[%s0 + $0x8] sm:$0xff]
    %v27 = vld [vmem:[#allocation2 + $0x8] sm:$0xff]
    %vm28 = vcmask 64512
    %v30 = vsel %vm28, %v25, 0
    %v33 = vsel %vm28, %v26, 0
    %35 = vmatprep.subr.mxu0 0.0
    %36 = vmatpush1.msra.mxu0 %v27
    %37 = vmatprep.subr.mxu0 0.0
    %38 = vmatpush1.msra.mxu0 0.0
    %39 = vmatprep.subr.mxu0 0.0
    %40 = vmatpush1.msra.mxu0 0.0
    %41 = vmatprep.subr.mxu0 0.0
    %42 = vmatpush1.msra.mxu0 0.0
    %43 = vmatprep.subr.mxu0 0.0
    %44 = vmatpush1.msra.mxu0 0.0
    %45 = vmatprep.subr.mxu0 0.0
    %46 = vmatpush1.msra.mxu0 0.0
    %47 = vmatprep.subr.mxu0 0.0
    %48 = vmatpush1.msra.mxu0 0.0
    %49 = vmatprep.subr.mxu0 0.0
    %50 = vmatpush1.msra.mxu0 0.0
    %51 = vmatprep.subr.mxu0 0.0
    %52 = vmatpush1.msra.mxu0 0.0
    %53 = vmatprep.subr.mxu0 0.0
    %54 = vmatpush1.msra.mxu0 0.0
    %55 = vmatprep.subr.mxu0 0.0
    %56 = vmatpush1.msra.mxu0 0.0
    %57 = vmatprep.subr.mxu0 0.0
    %58 = vmatpush1.msra.mxu0 0.0
    %59 = vmatprep.subr.mxu0 0.0
    %60 = vmatpush1.msra.mxu0 0.0
    %61 = vmatprep.subr.mxu0 0.0
    %62 = vmatpush1.msra.mxu0 0.0
    %63 = vmatprep.subr.mxu0 0.0
    %64 = vmatpush1.msra.mxu0 0.0
    %65 = vmatprep.subr.mxu0 0.0
    %66 = vmatpush1.msra.mxu0 0.0
    %67 = vmatprep.subr.mxu0 0.0
    %68 = vmatpush1.msra.mxu0 0.0
    %69 = vmatprep.subr.mxu0 0.0
    %70 = vmatpush1.msra.mxu0 0.0
    %71 = vmatprep.subr.mxu0 0.0
    %72 = vmatpush1.msra.mxu0 0.0
    %73 = vmatprep.subr.mxu0 0.0
    %74 = vmatpush1.msra.mxu0 0.0
    %75 = vmatprep.subr.mxu0 0.0
    %76 = vmatpush1.msra.mxu0 0.0
    %77 = vmatprep.subr.mxu0 0.0
    %78 = vmatpush1.msra.mxu0 0.0
    %79 = vmatprep.subr.mxu0 0.0
    %80 = vmatpush1.msra.mxu0 0.0
    %81 = vmatprep.subr.mxu0 0.0
    %82 = vmatpush1.msra.mxu0 0.0
    %83 = vmatprep.subr.mxu0 0.0
    %84 = vmatpush1.msra.mxu0 0.0
    %85 = vmatprep.subr.mxu0 0.0
    %86 = vmatpush1.msra.mxu0 0.0
    %87 = vmatprep.subr.mxu0 0.0
    %88 = vmatpush1.msra.mxu0 0.0
    %89 = vmatprep.subr.mxu0 0.0
    %90 = vmatpush1.msra.mxu0 0.0
    %91 = vmatprep.subr.mxu0 0.0
    %92 = vmatpush1.msra.mxu0 0.0
    %93 = vmatprep.subr.mxu0 0.0
    %94 = vmatpush1.msra.mxu0 0.0
    %95 = vmatprep.subr.mxu0 0.0
    %96 = vmatpush1.msra.mxu0 0.0
    %97 = vmatprep.subr.mxu0 0.0
    %98 = vmatpush1.msra.mxu0 0.0
    %99 = vmatprep.mubr.f32.mxu0 0.0
    %100 = vmatmul.mubr.f32.gmra.mrb[0].mxu0 %v30
    %v101 = vpop.f32.mrb[0].mxu0
    %v102 = vadd.f32 0.0, %v101
    %v103 = vpop.f32.mrb[0].mxu0
    %104 = vmatprep.mubr.f32.mxu0 0.0
    %105 = vmatmul.mubr.f32.gmra.mrb[0].mxu0 %v33
    %v106 = vpop.f32.mrb[0].mxu0
    %v107 = vadd.f32 0.0, %v106
    %v108 = vpop.f32.mrb[0].mxu0
    %109 = vdwg.mxu0
    %v110 = vld [vmem:[#allocation2 + $0x50] sm:$0xff]
    %v111 = vld [vmem:[#allocation2 + $0xaa] sm:$0x1]
    %v112 = vlaneseq
    %v113 = vshrl.u32 %v112, 7
    %v114 = vsub.s32 0, %v113
    %v115 = vrot.slane %v111, %v114
    %116 = vmatprep.subr.mxu0 0.0
    %117 = vmatpush1.msra.mxu0 %v110
    %118 = vmatprep.subr.mxu0 0.0
    %119 = vmatpush1.msra.mxu0 0.0
    %120 = vmatprep.subr.mxu0 0.0
    %121 = vmatpush1.msra.mxu0 0.0
    %122 = vmatprep.subr.mxu0 0.0
    %123 = vmatpush1.msra.mxu0 0.0
    %124 = vmatprep.subr.mxu0 0.0
    %125 = vmatpush1.msra.mxu0 0.0
    %126 = vmatprep.subr.mxu0 0.0
    %127 = vmatpush1.msra.mxu0 0.0
    %128 = vmatprep.subr.mxu0 0.0
    %129 = vmatpush1.msra.mxu0 0.0
    %130 = vmatprep.subr.mxu0 0.0
    %131 = vmatpush1.msra.mxu0 0.0
    %132 = vmatprep.subr.mxu0 0.0
    %133 = vmatpush1.msra.mxu0 0.0
    %134 = vmatprep.subr.mxu0 0.0
    %135 = vmatpush1.msra.mxu0 0.0
    %136 = vmatprep.subr.mxu0 0.0
    %137 = vmatpush1.msra.mxu0 0.0
    %138 = vmatprep.subr.mxu0 0.0
    %139 = vmatpush1.msra.mxu0 0.0
    %140 = vmatprep.subr.mxu0 0.0
    %141 = vmatpush1.msra.mxu0 0.0
    %142 = vmatprep.subr.mxu0 0.0
    %143 = vmatpush1.msra.mxu0 0.0
    %144 = vmatprep.subr.mxu0 0.0
    %145 = vmatpush1.msra.mxu0 0.0
    %146 = vmatprep.subr.mxu0 0.0
    %147 = vmatpush1.msra.mxu0 0.0
    %148 = vmatprep.subr.mxu0 0.0
    %149 = vmatpush1.msra.mxu0 0.0
    %150 = vmatprep.subr.mxu0 0.0
    %151 = vmatpush1.msra.mxu0 0.0
    %152 = vmatprep.subr.mxu0 0.0
    %153 = vmatpush1.msra.mxu0 0.0
    %154 = vmatprep.subr.mxu0 0.0
    %155 = vmatpush1.msra.mxu0 0.0
    %156 = vmatprep.subr.mxu0 0.0
    %157 = vmatpush1.msra.mxu0 0.0
    %158 = vmatprep.subr.mxu0 0.0
    %159 = vmatpush1.msra.mxu0 0.0
    %160 = vmatprep.subr.mxu0 0.0
    %161 = vmatpush1.msra.mxu0 0.0
    %162 = vmatprep.subr.mxu0 0.0
    %163 = vmatpush1.msra.mxu0 0.0
    %164 = vmatprep.subr.mxu0 0.0
    %165 = vmatpush1.msra.mxu0 0.0
    %166 = vmatprep.subr.mxu0 0.0
    %167 = vmatpush1.msra.mxu0 0.0
    %168 = vmatprep.subr.mxu0 0.0
    %169 = vmatpush1.msra.mxu0 0.0
    %170 = vmatprep.subr.mxu0 0.0
    %171 = vmatpush1.msra.mxu0 0.0
    %172 = vmatprep.subr.mxu0 0.0
    %173 = vmatpush1.msra.mxu0 0.0
    %174 = vmatprep.subr.mxu0 0.0
    %175 = vmatpush1.msra.mxu0 0.0
    %176 = vmatprep.subr.mxu0 0.0
    %177 = vmatpush1.msra.mxu0 0.0
    %178 = vmatprep.subr.mxu0 0.0
    %179 = vmatpush1.msra.mxu0 0.0
    %180 = vmatprep.mubr.f32.mxu0 0.0
    %181 = vmatmul.mubr.f32.gmra.mrb[0].mxu0 %v30
    %v182 = vpop.f32.mrb[0].mxu0
    %v183 = vadd.f32 %v115, %v182
    %v184 = vpop.f32.mrb[0].mxu0
    %185 = vmatprep.mubr.f32.mxu0 0.0
    %186 = vmatmul.mubr.f32.gmra.mrb[0].mxu0 %v33
    %v187 = vpop.f32.mrb[0].mxu0
    %v188 = vadd.f32 %v115, %v187
    %v189 = vpop.f32.mrb[0].mxu0
    %190 = vdwg.mxu0
    %v191 = vmax.f32 %v183, 0.0
    %v192 = vmax.f32 %v188, 0.0
    %v193 = vld [vmem:[#allocation2] sm:$0xff]
    %v194 = vld [vmem:[#allocation2 + $0xa8] sm:$0x1]
    %v195 = vlaneseq
    %v196 = vshrl.u32 %v195, 7
    %v197 = vsub.s32 0, %v196
    %v198 = vrot.slane %v194, %v197
    %199 = vmatprep.subr.mxu0 0.0
    %200 = vmatpush1.msra.mxu0 %v193
    %201 = vmatprep.subr.mxu0 0.0
    %202 = vmatpush1.msra.mxu0 0.0
    %203 = vmatprep.subr.mxu0 0.0
    %204 = vmatpush1.msra.mxu0 0.0
    %205 = vmatprep.subr.mxu0 0.0
    %206 = vmatpush1.msra.mxu0 0.0
    %207 = vmatprep.subr.mxu0 0.0
    %208 = vmatpush1.msra.mxu0 0.0
    %209 = vmatprep.subr.mxu0 0.0
    %210 = vmatpush1.msra.mxu0 0.0
    %211 = vmatprep.subr.mxu0 0.0
    %212 = vmatpush1.msra.mxu0 0.0
    %213 = vmatprep.subr.mxu0 0.0
    %214 = vmatpush1.msra.mxu0 0.0
    %215 = vmatprep.subr.mxu0 0.0
    %216 = vmatpush1.msra.mxu0 0.0
    %217 = vmatprep.subr.mxu0 0.0
    %218 = vmatpush1.msra.mxu0 0.0
    %219 = vmatprep.subr.mxu0 0.0
    %220 = vmatpush1.msra.mxu0 0.0
    %221 = vmatprep.subr.mxu0 0.0
    %222 = vmatpush1.msra.mxu0 0.0
    %223 = vmatprep.subr.mxu0 0.0
    %224 = vmatpush1.msra.mxu0 0.0
    %225 = vmatprep.subr.mxu0 0.0
    %226 = vmatpush1.msra.mxu0 0.0
    %227 = vmatprep.subr.mxu0 0.0
    %228 = vmatpush1.msra.mxu0 0.0
    %229 = vmatprep.subr.mxu0 0.0
    %230 = vmatpush1.msra.mxu0 0.0
    %231 = vmatprep.subr.mxu0 0.0
    %232 = vmatpush1.msra.mxu0 0.0
    %233 = vmatprep.subr.mxu0 0.0
    %234 = vmatpush1.msra.mxu0 0.0
    %235 = vmatprep.subr.mxu0 0.0
    %236 = vmatpush1.msra.mxu0 0.0
    %237 = vmatprep.subr.mxu0 0.0
    %238 = vmatpush1.msra.mxu0 0.0
    %239 = vmatprep.subr.mxu0 0.0
    %240 = vmatpush1.msra.mxu0 0.0
    %241 = vmatprep.subr.mxu0 0.0
    %242 = vmatpush1.msra.mxu0 0.0
    %243 = vmatprep.subr.mxu0 0.0
    %244 = vmatpush1.msra.mxu0 0.0
    %245 = vmatprep.subr.mxu0 0.0
    %246 = vmatpush1.msra.mxu0 0.0
    %247 = vmatprep.subr.mxu0 0.0
    %248 = vmatpush1.msra.mxu0 0.0
    %249 = vmatprep.subr.mxu0 0.0
    %250 = vmatpush1.msra.mxu0 0.0
    %251 = vmatprep.subr.mxu0 0.0
    %252 = vmatpush1.msra.mxu0 0.0
    %253 = vmatprep.subr.mxu0 0.0
    %254 = vmatpush1.msra.mxu0 0.0
    %255 = vmatprep.subr.mxu0 0.0
    %256 = vmatpush1.msra.mxu0 0.0
    %257 = vmatprep.subr.mxu0 0.0
    %258 = vmatpush1.msra.mxu0 0.0
    %259 = vmatprep.subr.mxu0 0.0
    %260 = vmatpush1.msra.mxu0 0.0
    %261 = vmatprep.subr.mxu0 0.0
    %262 = vmatpush1.msra.mxu0 0.0
    %263 = vmatprep.mubr.f32.mxu0 0.0
    %264 = vmatmul.mubr.f32.gmra.mrb[0].mxu0 %v30
    %v265 = vpop.f32.mrb[0].mxu0
    %v266 = vadd.f32 %v198, %v265
    %v267 = vpop.f32.mrb[0].mxu0
    %268 = vmatprep.mubr.f32.mxu0 0.0
    %269 = vmatmul.mubr.f32.gmra.mrb[0].mxu0 %v33
    %v270 = vpop.f32.mrb[0].mxu0
    %v271 = vadd.f32 %v198, %v270
    %v272 = vpop.f32.mrb[0].mxu0
    %273 = vdwg.mxu0
    %v274 = vmax.f32 %v266, 0.0
    %v275 = vmax.f32 %v271, 0.0
    %v276 = vld [vmem:[#allocation2 + $0x10] sm:$0xff]
    %v277 = vld [vmem:[#allocation2 + $0x18] sm:$0xff]
    %v278 = vld [vmem:[#allocation2 + $0x20] sm:$0xff]
    %v279 = vld [vmem:[#allocation2 + $0x28] sm:$0xff]
    %v280 = vld [vmem:[#allocation2 + $0x30] sm:$0xff]
    %v281 = vld [vmem:[#allocation2 + $0x38] sm:$0xff]
    %v282 = vld [vmem:[#allocation2 + $0x40] sm:$0xff]
    %v283 = vld [vmem:[#allocation2 + $0x48] sm:$0xff]
    %vm284 = vcmask 523264
    %v286 = vsel %vm284, %v274, 0
    %v289 = vsel %vm284, %v275, 0
    %291 = vmatprep.subr.mxu0 0.0
    %292 = vmatpush1.msra.mxu0 %v276
    %293 = vmatprep.subr.mxu0 0.0
    %294 = vmatpush1.msra.mxu0 %v277
    %295 = vmatprep.subr.mxu0 0.0
    %296 = vmatpush1.msra.mxu0 %v278
    %297 = vmatprep.subr.mxu0 0.0
    %298 = vmatpush1.msra.mxu0 %v279
    %299 = vmatprep.subr.mxu0 0.0
    %300 = vmatpush1.msra.mxu0 %v280
    %301 = vmatprep.subr.mxu0 0.0
    %302 = vmatpush1.msra.mxu0 %v281
    %303 = vmatprep.subr.mxu0 0.0
    %304 = vmatpush1.msra.mxu0 %v282
    %305 = vmatprep.subr.mxu0 0.0
    %306 = vmatpush1.msra.mxu0 %v283
    %307 = vmatprep.subr.mxu0 0.0
    %308 = vmatpush1.msra.mxu0 0.0
    %309 = vmatprep.subr.mxu0 0.0
    %310 = vmatpush1.msra.mxu0 0.0
    %311 = vmatprep.subr.mxu0 0.0
    %312 = vmatpush1.msra.mxu0 0.0
    %313 = vmatprep.subr.mxu0 0.0
    %314 = vmatpush1.msra.mxu0 0.0
    %315 = vmatprep.subr.mxu0 0.0
    %316 = vmatpush1.msra.mxu0 0.0
    %317 = vmatprep.subr.mxu0 0.0
    %318 = vmatpush1.msra.mxu0 0.0
    %319 = vmatprep.subr.mxu0 0.0
    %320 = vmatpush1.msra.mxu0 0.0
    %321 = vmatprep.subr.mxu0 0.0
    %322 = vmatpush1.msra.mxu0 0.0
    %323 = vmatprep.subr.mxu0 0.0
    %324 = vmatpush1.msra.mxu0 0.0
    %325 = vmatprep.subr.mxu0 0.0
    %326 = vmatpush1.msra.mxu0 0.0
    %327 = vmatprep.subr.mxu0 0.0
    %328 = vmatpush1.msra.mxu0 0.0
    %329 = vmatprep.subr.mxu0 0.0
    %330 = vmatpush1.msra.mxu0 0.0
    %331 = vmatprep.subr.mxu0 0.0
    %332 = vmatpush1.msra.mxu0 0.0
    %333 = vmatprep.subr.mxu0 0.0
    %334 = vmatpush1.msra.mxu0 0.0
    %335 = vmatprep.subr.mxu0 0.0
    %336 = vmatpush1.msra.mxu0 0.0
    %337 = vmatprep.subr.mxu0 0.0
    %338 = vmatpush1.msra.mxu0 0.0
    %339 = vmatprep.subr.mxu0 0.0
    %340 = vmatpush1.msra.mxu0 0.0
    %341 = vmatprep.subr.mxu0 0.0
    %342 = vmatpush1.msra.mxu0 0.0
    %343 = vmatprep.subr.mxu0 0.0
    %344 = vmatpush1.msra.mxu0 0.0
    %345 = vmatprep.subr.mxu0 0.0
    %346 = vmatpush1.msra.mxu0 0.0
    %347 = vmatprep.subr.mxu0 0.0
    %348 = vmatpush1.msra.mxu0 0.0
    %349 = vmatprep.subr.mxu0 0.0
    %350 = vmatpush1.msra.mxu0 0.0
    %351 = vmatprep.subr.mxu0 0.0
    %352 = vmatpush1.msra.mxu0 0.0
    %353 = vmatprep.subr.mxu0 0.0
    %354 = vmatpush1.msra.mxu0 0.0
    %355 = vmatprep.mubr.f32.mxu0 0.0
    %356 = vmatmul.mubr.f32.gmra.mrb[0].mxu0 %v286
    %v357 = vpop.f32.mrb[0].mxu0
    %v358 = vadd.f32 %v102, %v357
    %v359 = vpop.f32.mrb[0].mxu0
    %360 = vmatprep.mubr.f32.mxu0 0.0
    %361 = vmatmul.mubr.f32.gmra.mrb[0].mxu0 %v289
    %v362 = vpop.f32.mrb[0].mxu0
    %v363 = vadd.f32 %v107, %v362
    %v364 = vpop.f32.mrb[0].mxu0
    %365 = vdwg.mxu0
    %v366 = vld [vmem:[#allocation2 + $0xa9] sm:$0x1]
    %v367 = vlaneseq
    %v368 = vshrl.u32 %v367, 7
    %v369 = vsub.s32 0, %v368
    %v370 = vrot.slane %v366, %v369
    %v371 = vadd.f32 %v358, %v370
    %v372 = vadd.f32 %v363, %v370
    %v373 = vmax.f32 %v371, 0.0
    %v374 = vmax.f32 %v372, 0.0
    %v375 = vld [vmem:[#allocation2 + $0x78] sm:$0xff]
    %v376 = vld [vmem:[#allocation2 + $0x80] sm:$0xff]
    %v377 = vld [vmem:[#allocation2 + $0x88] sm:$0xff]
    %v378 = vld [vmem:[#allocation2 + $0x90] sm:$0xff]
    %vm379 = vcmask 261120
    %v381 = vsel %vm379, %v373, 0
    %v384 = vsel %vm379, %v374, 0
    %386 = vmatprep.subr.mxu0 0.0
    %387 = vmatpush1.msra.mxu0 %v375
    %388 = vmatprep.subr.mxu0 0.0
    %389 = vmatpush1.msra.mxu0 %v376
    %390 = vmatprep.subr.mxu0 0.0
    %391 = vmatpush1.msra.mxu0 %v377
    %392 = vmatprep.subr.mxu0 0.0
    %393 = vmatpush1.msra.mxu0 %v378
    %394 = vmatprep.subr.mxu0 0.0
    %395 = vmatpush1.msra.mxu0 0.0
    %396 = vmatprep.subr.mxu0 0.0
    %397 = vmatpush1.msra.mxu0 0.0
    %398 = vmatprep.subr.mxu0 0.0
    %399 = vmatpush1.msra.mxu0 0.0
    %400 = vmatprep.subr.mxu0 0.0
    %401 = vmatpush1.msra.mxu0 0.0
    %402 = vmatprep.subr.mxu0 0.0
    %403 = vmatpush1.msra.mxu0 0.0
    %404 = vmatprep.subr.mxu0 0.0
    %405 = vmatpush1.msra.mxu0 0.0
    %406 = vmatprep.subr.mxu0 0.0
    %407 = vmatpush1.msra.mxu0 0.0
    %408 = vmatprep.subr.mxu0 0.0
    %409 = vmatpush1.msra.mxu0 0.0
    %410 = vmatprep.subr.mxu0 0.0
    %411 = vmatpush1.msra.mxu0 0.0
    %412 = vmatprep.subr.mxu0 0.0
    %413 = vmatpush1.msra.mxu0 0.0
    %414 = vmatprep.subr.mxu0 0.0
    %415 = vmatpush1.msra.mxu0 0.0
    %416 = vmatprep.subr.mxu0 0.0
    %417 = vmatpush1.msra.mxu0 0.0
    %418 = vmatprep.subr.mxu0 0.0
    %419 = vmatpush1.msra.mxu0 0.0
    %420 = vmatprep.subr.mxu0 0.0
    %421 = vmatpush1.msra.mxu0 0.0
    %422 = vmatprep.subr.mxu0 0.0
    %423 = vmatpush1.msra.mxu0 0.0
    %424 = vmatprep.subr.mxu0 0.0
    %425 = vmatpush1.msra.mxu0 0.0
    %426 = vmatprep.subr.mxu0 0.0
    %427 = vmatpush1.msra.mxu0 0.0
    %428 = vmatprep.subr.mxu0 0.0
    %429 = vmatpush1.msra.mxu0 0.0
    %430 = vmatprep.subr.mxu0 0.0
    %431 = vmatpush1.msra.mxu0 0.0
    %432 = vmatprep.subr.mxu0 0.0
    %433 = vmatpush1.msra.mxu0 0.0
    %434 = vmatprep.subr.mxu0 0.0
    %435 = vmatpush1.msra.mxu0 0.0
    %436 = vmatprep.subr.mxu0 0.0
    %437 = vmatpush1.msra.mxu0 0.0
    %438 = vmatprep.subr.mxu0 0.0
    %439 = vmatpush1.msra.mxu0 0.0
    %440 = vmatprep.subr.mxu0 0.0
    %441 = vmatpush1.msra.mxu0 0.0
    %442 = vmatprep.subr.mxu0 0.0
    %443 = vmatpush1.msra.mxu0 0.0
    %444 = vmatprep.subr.mxu0 0.0
    %445 = vmatpush1.msra.mxu0 0.0
    %446 = vmatprep.subr.mxu0 0.0
    %447 = vmatpush1.msra.mxu0 0.0
    %448 = vmatprep.subr.mxu0 0.0
    %449 = vmatpush1.msra.mxu0 0.0
    %450 = vmatprep.mubr.f32.mxu0 0.0
    %451 = vmatmul.mubr.f32.gmra.mrb[0].mxu0 %v381
    %v452 = vpop.f32.mrb[0].mxu0
    %v453 = vadd.f32 0.0, %v452
    %v454 = vpop.f32.mrb[0].mxu0
    %455 = vmatprep.mubr.f32.mxu0 0.0
    %456 = vmatmul.mubr.f32.gmra.mrb[0].mxu0 %v384
    %v457 = vpop.f32.mrb[0].mxu0
    %v458 = vadd.f32 0.0, %v457
    %v459 = vpop.f32.mrb[0].mxu0
    %460 = vdwg.mxu0
    %v461 = vld [vmem:[#allocation2 + $0x58] sm:$0xff]
    %v462 = vld [vmem:[#allocation2 + $0x60] sm:$0xff]
    %v463 = vld [vmem:[#allocation2 + $0x68] sm:$0xff]
    %v464 = vld [vmem:[#allocation2 + $0x70] sm:$0xff]
    %v465 = vld [vmem:[#allocation2 + $0xab] sm:$0x1]
    %v466 = vlaneseq
    %v467 = vshrl.u32 %v466, 7
    %v468 = vsub.s32 0, %v467
    %v469 = vrot.slane %v465, %v468
    %470 = vmatprep.subr.mxu0 0.0
    %471 = vmatpush1.msra.mxu0 %v461
    %472 = vmatprep.subr.mxu0 0.0
    %473 = vmatpush1.msra.mxu0 %v462
    %474 = vmatprep.subr.mxu0 0.0
    %475 = vmatpush1.msra.mxu0 %v463
    %476 = vmatprep.subr.mxu0 0.0
    %477 = vmatpush1.msra.mxu0 %v464
    %478 = vmatprep.subr.mxu0 0.0
    %479 = vmatpush1.msra.mxu0 0.0
    %480 = vmatprep.subr.mxu0 0.0
    %481 = vmatpush1.msra.mxu0 0.0
    %482 = vmatprep.subr.mxu0 0.0
    %483 = vmatpush1.msra.mxu0 0.0
    %484 = vmatprep.subr.mxu0 0.0
    %485 = vmatpush1.msra.mxu0 0.0
    %486 = vmatprep.subr.mxu0 0.0
    %487 = vmatpush1.msra.mxu0 0.0
    %488 = vmatprep.subr.mxu0 0.0
    %489 = vmatpush1.msra.mxu0 0.0
    %490 = vmatprep.subr.mxu0 0.0
    %491 = vmatpush1.msra.mxu0 0.0
    %492 = vmatprep.subr.mxu0 0.0
    %493 = vmatpush1.msra.mxu0 0.0
    %494 = vmatprep.subr.mxu0 0.0
    %495 = vmatpush1.msra.mxu0 0.0
    %496 = vmatprep.subr.mxu0 0.0
    %497 = vmatpush1.msra.mxu0 0.0
    %498 = vmatprep.subr.mxu0 0.0
    %499 = vmatpush1.msra.mxu0 0.0
    %500 = vmatprep.subr.mxu0 0.0
    %501 = vmatpush1.msra.mxu0 0.0
    %502 = vmatprep.subr.mxu0 0.0
    %503 = vmatpush1.msra.mxu0 0.0
    %504 = vmatprep.subr.mxu0 0.0
    %505 = vmatpush1.msra.mxu0 0.0
    %506 = vmatprep.subr.mxu0 0.0
    %507 = vmatpush1.msra.mxu0 0.0
    %508 = vmatprep.subr.mxu0 0.0
    %509 = vmatpush1.msra.mxu0 0.0
    %510 = vmatprep.subr.mxu0 0.0
    %511 = vmatpush1.msra.mxu0 0.0
    %512 = vmatprep.subr.mxu0 0.0
    %513 = vmatpush1.msra.mxu0 0.0
    %514 = vmatprep.subr.mxu0 0.0
    %515 = vmatpush1.msra.mxu0 0.0
    %516 = vmatprep.subr.mxu0 0.0
    %517 = vmatpush1.msra.mxu0 0.0
    %518 = vmatprep.subr.mxu0 0.0
    %519 = vmatpush1.msra.mxu0 0.0
    %520 = vmatprep.subr.mxu0 0.0
    %521 = vmatpush1.msra.mxu0 0.0
    %522 = vmatprep.subr.mxu0 0.0
    %523 = vmatpush1.msra.mxu0 0.0
    %524 = vmatprep.subr.mxu0 0.0
    %525 = vmatpush1.msra.mxu0 0.0
    %526 = vmatprep.subr.mxu0 0.0
    %527 = vmatpush1.msra.mxu0 0.0
    %528 = vmatprep.subr.mxu0 0.0
    %529 = vmatpush1.msra.mxu0 0.0
    %530 = vmatprep.subr.mxu0 0.0
    %531 = vmatpush1.msra.mxu0 0.0
    %532 = vmatprep.subr.mxu0 0.0
    %533 = vmatpush1.msra.mxu0 0.0
    %534 = vmatprep.mubr.f32.mxu0 0.0
    %535 = vmatmul.mubr.f32.gmra.mrb[0].mxu0 %v381
    %v536 = vpop.f32.mrb[0].mxu0
    %v537 = vadd.f32 %v469, %v536
    %v538 = vpop.f32.mrb[0].mxu0
    %539 = vmatprep.mubr.f32.mxu0 0.0
    %540 = vmatmul.mubr.f32.gmra.mrb[0].mxu0 %v384
    %v541 = vpop.f32.mrb[0].mxu0
    %v542 = vadd.f32 %v469, %v541
    %v543 = vpop.f32.mrb[0].mxu0
    %544 = vdwg.mxu0
    %v545 = vmax.f32 %v537, 0.0
    %v546 = vmax.f32 %v542, 0.0
    %v547 = vld [vmem:[#allocation2 + $0x98] sm:$0xf]
    %v548 = vld [vmem:[#allocation2 + $0xa0] sm:$0xf]
    %vm549 = vcmask 31744
    %v551 = vsel %vm549, %v191, 0
    %v554 = vsel %vm549, %v192, 0
    %vm556 = vcmask 1043456
    %v558 = vsel %vm556, %v548, 0
    %560 = vmatprep.subr.mxu0 0.0
    %561 = vmatpush1.msra.mxu0 %v558
    %562 = vmatprep.subr.mxu0 0.0
    %563 = vmatpush1.msra.mxu0 0.0
    %564 = vmatprep.subr.mxu0 0.0
    %565 = vmatpush1.msra.mxu0 0.0
    %566 = vmatprep.subr.mxu0 0.0
    %567 = vmatpush1.msra.mxu0 0.0
    %568 = vmatprep.subr.mxu0 0.0
    %569 = vmatpush1.msra.mxu0 0.0
    %570 = vmatprep.subr.mxu0 0.0
    %571 = vmatpush1.msra.mxu0 0.0
    %572 = vmatprep.subr.mxu0 0.0
    %573 = vmatpush1.msra.mxu0 0.0
    %574 = vmatprep.subr.mxu0 0.0
    %575 = vmatpush1.msra.mxu0 0.0
    %576 = vmatprep.subr.mxu0 0.0
    %577 = vmatpush1.msra.mxu0 0.0
    %578 = vmatprep.subr.mxu0 0.0
    %579 = vmatpush1.msra.mxu0 0.0
    %580 = vmatprep.subr.mxu0 0.0
    %581 = vmatpush1.msra.mxu0 0.0
    %582 = vmatprep.subr.mxu0 0.0
    %583 = vmatpush1.msra.mxu0 0.0
    %584 = vmatprep.subr.mxu0 0.0
    %585 = vmatpush1.msra.mxu0 0.0
    %586 = vmatprep.subr.mxu0 0.0
    %587 = vmatpush1.msra.mxu0 0.0
    %588 = vmatprep.subr.mxu0 0.0
    %589 = vmatpush1.msra.mxu0 0.0
    %590 = vmatprep.subr.mxu0 0.0
    %591 = vmatpush1.msra.mxu0 0.0
    %592 = vmatprep.subr.mxu0 0.0
    %593 = vmatpush1.msra.mxu0 0.0
    %594 = vmatprep.subr.mxu0 0.0
    %595 = vmatpush1.msra.mxu0 0.0
    %596 = vmatprep.subr.mxu0 0.0
    %597 = vmatpush1.msra.mxu0 0.0
    %598 = vmatprep.subr.mxu0 0.0
    %599 = vmatpush1.msra.mxu0 0.0
    %600 = vmatprep.subr.mxu0 0.0
    %601 = vmatpush1.msra.mxu0 0.0
    %602 = vmatprep.subr.mxu0 0.0
    %603 = vmatpush1.msra.mxu0 0.0
    %604 = vmatprep.subr.mxu0 0.0
    %605 = vmatpush1.msra.mxu0 0.0
    %606 = vmatprep.subr.mxu0 0.0
    %607 = vmatpush1.msra.mxu0 0.0
    %608 = vmatprep.subr.mxu0 0.0
    %609 = vmatpush1.msra.mxu0 0.0
    %610 = vmatprep.subr.mxu0 0.0
    %611 = vmatpush1.msra.mxu0 0.0
    %612 = vmatprep.subr.mxu0 0.0
    %613 = vmatpush1.msra.mxu0 0.0
    %614 = vmatprep.subr.mxu0 0.0
    %615 = vmatpush1.msra.mxu0 0.0
    %616 = vmatprep.subr.mxu0 0.0
    %617 = vmatpush1.msra.mxu0 0.0
    %618 = vmatprep.subr.mxu0 0.0
    %619 = vmatpush1.msra.mxu0 0.0
    %620 = vmatprep.subr.mxu0 0.0
    %621 = vmatpush1.msra.mxu0 0.0
    %622 = vmatprep.subr.mxu0 0.0
    %623 = vmatpush1.msra.mxu0 0.0
    %624 = vmatprep.mubr.f32.mxu0 0.0
    %625 = vmatmul.mubr.f32.gmra.mrb[0].mxu0 %v551
    %v626 = vpop.f32.mrb[0].mxu0
    %v627 = vadd.f32 0.0, %v626
    %v628 = vpop.f32.mrb[0].mxu0
    %629 = vmatprep.mubr.f32.mxu0 0.0
    %630 = vmatmul.mubr.f32.gmra.mrb[0].mxu0 %v554
    %v631 = vpop.f32.mrb[0].mxu0
    %v632 = vadd.f32 0.0, %v631
    %v633 = vpop.f32.mrb[0].mxu0
    %634 = vdwg.mxu0
    %v636 = vsel %vm549, %v545, 0
    %v639 = vsel %vm549, %v546, 0
    %v642 = vsel %vm556, %v547, 0
    %644 = vmatprep.subr.mxu0 0.0
    %645 = vmatpush1.msra.mxu0 %v642
    %646 = vmatprep.subr.mxu0 0.0
    %647 = vmatpush1.msra.mxu0 0.0
    %648 = vmatprep.subr.mxu0 0.0
    %649 = vmatpush1.msra.mxu0 0.0
    %650 = vmatprep.subr.mxu0 0.0
    %651 = vmatpush1.msra.mxu0 0.0
    %652 = vmatprep.subr.mxu0 0.0
    %653 = vmatpush1.msra.mxu0 0.0
    %654 = vmatprep.subr.mxu0 0.0
    %655 = vmatpush1.msra.mxu0 0.0
    %656 = vmatprep.subr.mxu0 0.0
    %657 = vmatpush1.msra.mxu0 0.0
    %658 = vmatprep.subr.mxu0 0.0
    %659 = vmatpush1.msra.mxu0 0.0
    %660 = vmatprep.subr.mxu0 0.0
    %661 = vmatpush1.msra.mxu0 0.0
    %662 = vmatprep.subr.mxu0 0.0
    %663 = vmatpush1.msra.mxu0 0.0
    %664 = vmatprep.subr.mxu0 0.0
    %665 = vmatpush1.msra.mxu0 0.0
    %666 = vmatprep.subr.mxu0 0.0
    %667 = vmatpush1.msra.mxu0 0.0
    %668 = vmatprep.subr.mxu0 0.0
    %669 = vmatpush1.msra.mxu0 0.0
    %670 = vmatprep.subr.mxu0 0.0
    %671 = vmatpush1.msra.mxu0 0.0
    %672 = vmatprep.subr.mxu0 0.0
    %673 = vmatpush1.msra.mxu0 0.0
    %674 = vmatprep.subr.mxu0 0.0
    %675 = vmatpush1.msra.mxu0 0.0
    %676 = vmatprep.subr.mxu0 0.0
    %677 = vmatpush1.msra.mxu0 0.0
    %678 = vmatprep.subr.mxu0 0.0
    %679 = vmatpush1.msra.mxu0 0.0
    %680 = vmatprep.subr.mxu0 0.0
    %681 = vmatpush1.msra.mxu0 0.0
    %682 = vmatprep.subr.mxu0 0.0
    %683 = vmatpush1.msra.mxu0 0.0
    %684 = vmatprep.subr.mxu0 0.0
    %685 = vmatpush1.msra.mxu0 0.0
    %686 = vmatprep.subr.mxu0 0.0
    %687 = vmatpush1.msra.mxu0 0.0
    %688 = vmatprep.subr.mxu0 0.0
    %689 = vmatpush1.msra.mxu0 0.0
    %690 = vmatprep.subr.mxu0 0.0
    %691 = vmatpush1.msra.mxu0 0.0
    %692 = vmatprep.subr.mxu0 0.0
    %693 = vmatpush1.msra.mxu0 0.0
    %694 = vmatprep.subr.mxu0 0.0
    %695 = vmatpush1.msra.mxu0 0.0
    %696 = vmatprep.subr.mxu0 0.0
    %697 = vmatpush1.msra.mxu0 0.0
    %698 = vmatprep.subr.mxu0 0.0
    %699 = vmatpush1.msra.mxu0 0.0
    %700 = vmatprep.subr.mxu0 0.0
    %701 = vmatpush1.msra.mxu0 0.0
    %702 = vmatprep.subr.mxu0 0.0
    %703 = vmatpush1.msra.mxu0 0.0
    %704 = vmatprep.subr.mxu0 0.0
    %705 = vmatpush1.msra.mxu0 0.0
    %706 = vmatprep.subr.mxu0 0.0
    %707 = vmatpush1.msra.mxu0 0.0
    %708 = vmatprep.mubr.f32.mxu0 0.0
    %709 = vmatmul.mubr.f32.gmra.mrb[0].mxu0 %v636
    %v710 = vpop.f32.mrb[0].mxu0
    %v711 = vadd.f32 %v627, %v710
    %v712 = vpop.f32.mrb[0].mxu0
    %713 = vmatprep.mubr.f32.mxu0 0.0
    %714 = vmatmul.mubr.f32.gmra.mrb[0].mxu0 %v639
    %v715 = vpop.f32.mrb[0].mxu0
    %v716 = vadd.f32 %v632, %v715
    %v717 = vpop.f32.mrb[0].mxu0
    %718 = vdwg.mxu0
    %v719 = vadd.f32 %v711, %v453
    %v720 = vadd.f32 %v716, %v458
    %v721 = vld [vmem:[#allocation2 + $0xac] sm:$0x1]
    %v722 = vlaneseq
    %v723 = vshrl.u32 %v722, 7
    %v724 = vsub.s32 0, %v723
    %v725 = vrot.slane %v721, %v724
    %v726 = vadd.f32 %v719, %v725
    %v727 = vadd.f32 %v720, %v725
    %728 = vst.msk [vmem:[%s2] sm:$0xff] %vm549, %v726
    %729 = vst.msk [vmem:[%s2 + $0x8] sm:$0xff] %vm549, %v727
    // Predicated region
    $region14: #{tpu_custom_call.1} parent=1 // pred_check
      _
    $region15: #{tpu_custom_call.1} parent=1 // pred_check_branch
      %731 = sbr.rel (0) target = $region17
    $region16: #{tpu_custom_call.1} parent=1 // pred_region
      _
    $region17: #{tpu_custom_call.1} parent=1 // pred_fallthru
      _
    // Predicated region
    $region18: #{tpu_custom_call.1} parent=1 // pred_check
      _
    $region19: #{tpu_custom_call.1} parent=1 // pred_check_branch
      %733 = sbr.rel (0) target = $region21
    $region20: #{tpu_custom_call.1} parent=1 // pred_region
      _
    $region21: #{tpu_custom_call.1} parent=1 // pred_fallthru
      _
    %734 = vsyncpa [#allocation3], 1

</llo_original>
